<compile_context>
chip_gen: v7x
topology: tpu7x:2x2x1
jax: 0.10.0
libtpu: 0.0.40
codegen_flags: <defaults>
</compile_context>

<pallas_src>
import jax
import jax.numpy as jnp
from jax.experimental import pallas as pl
from jax.experimental.pallas import tpu as pltpu

IN_DIM = 4
HID_DIM = 8
OUT_DIM = 3


def multiclass_kernel(x_ref, w1_ref, b1_ref, w2_ref, b2_ref, o_ref):
    # x_ref:  (4, TB)   x^T batch tile (batch on lanes)
    # w1_ref: (8, 4)    W1^T              (VMEM-resident, fetched once)
    # b1_ref: (8, 1)
    # w2_ref: (8, 8)    W2^T zero-padded to 8 class rows (rows 3..7 unused)
    # b2_ref: (3, 1)
    # o_ref:  (3, TB)   log_softmax(logits)^T
    x = x_ref[...]                       # (4, TB)
    w1 = w1_ref[...]                     # (8, 4)

    # Hidden layer: h^T = W1^T @ x^T as 4 rank-1 broadcast FMAs on the VPU
    # (contraction dim is only 4 — not worth an MXU pass).
    h = w1[:, 0:1] * x[0:1, :]
    for k in range(1, IN_DIM):
        h = h + w1[:, k : k + 1] * x[k : k + 1, :]
    h = jnp.maximum(h + b1_ref[...], 0.0)            # (8, TB)

    # Output layer on the MXU: (8,8) @ (8,TB) -> keep only the 3 real class rows.
    logits = jnp.dot(w2_ref[...], h, preferred_element_type=jnp.float32)[0:OUT_DIM, :]
    logits = logits + b2_ref[...]                    # (3, TB)

    # Numerically-stable log_softmax over the 3 class rows (sublane axis) only.
    m = jnp.max(logits, axis=0, keepdims=True)       # (1, TB)
    z = logits - m
    lse = jnp.log(jnp.sum(jnp.exp(z), axis=0, keepdims=True))
    o_ref[...] = z - lse


def _round_up(x, m):
    return ((x + m - 1) // m) * m


def multiclass_forward(x, w1, b1, w2, b2, *, max_lane_tile=65536):
    """x: (n, 4); w1: (4, 8); b1: (1, 8); w2: (8, 3); b2: (1, 3). Returns (n, 3)."""
    n = x.shape[0]

    # Lane tile: multiple of 128; big enough to amortize per-step overhead but
    # small enough (~12 MiB total footprint) to fit every generation's scoped
    # VMEM. For n > max_lane_tile the grid automatically has >= 2 steps.
    n128 = _round_up(max(n, 1), 128)
    tb = min(max_lane_tile, n128)
    n_pad = _round_up(n128, tb)
    grid = (n_pad // tb,)

    # Minimal host-side prep: transpose x to batch-on-lanes (and zero-pad only
    # the batch remainder); weights/biases are tiny and stay VMEM-resident.
    xt = x.T.astype(jnp.float32)                                   # (4, n)
    if n_pad != n:
        xt = jnp.zeros((IN_DIM, n_pad), jnp.float32).at[:, :n].set(xt)
    w1t = w1.T.astype(jnp.float32)                                 # (8, 4)
    b1t = jnp.reshape(b1, (HID_DIM, 1)).astype(jnp.float32)        # (8, 1)
    w2p = jnp.zeros((HID_DIM, HID_DIM), jnp.float32).at[:OUT_DIM, :].set(
        w2.T.astype(jnp.float32))                                  # (8, 8)
    b2t = jnp.reshape(b2, (OUT_DIM, 1)).astype(jnp.float32)        # (3, 1)

    cost = pl.CostEstimate(
        flops=2 * n_pad * (IN_DIM * HID_DIM + HID_DIM * OUT_DIM),
        transcendentals=(OUT_DIM + 1) * n_pad,   # 3 exp + 1 log per sample
        bytes_accessed=4 * (xt.size + w1t.size + b1t.size + w2p.size + b2t.size
                            + OUT_DIM * n_pad),
    )

    out_t = pl.pallas_call(
        multiclass_kernel,
        out_shape=jax.ShapeDtypeStruct((OUT_DIM, n_pad), jnp.float32),
        grid=grid,
        in_specs=[
            pl.BlockSpec((IN_DIM, tb), lambda i: (0, i)),     # x^T: tiled over batch lanes
            pl.BlockSpec((HID_DIM, IN_DIM), lambda i: (0, 0)),   # W1^T: resident
            pl.BlockSpec((HID_DIM, 1), lambda i: (0, 0)),        # b1:  resident
            pl.BlockSpec((HID_DIM, HID_DIM), lambda i: (0, 0)),  # W2^T (padded): resident
            pl.BlockSpec((OUT_DIM, 1), lambda i: (0, 0)),        # b2:  resident
        ],
        out_specs=pl.BlockSpec((OUT_DIM, tb), lambda i: (0, i)),
        compiler_params=pltpu.CompilerParams(
            dimension_semantics=("parallel",),    # megacore-shardable batch axis
            vmem_limit_bytes=32 << 20,            # actual footprint ~12 MiB
        ),
        cost_estimate=cost,
    )(xt, w1t, b1t, w2p, b2t)

    # Small (3, n) transpose back to the PyTorch-convention (n, 3) output.
    return out_t[:, :n].T


def init_params(key):
    # nn.Linear default init: U(-1/sqrt(fan_in), +1/sqrt(fan_in)); weights stored
    # as (in_features, out_features) so the math is x @ W + b.
    k1, k2, k3, k4 = jax.random.split(key, 4)
    bound1 = 1.0 / jnp.sqrt(4.0)
    bound2 = 1.0 / jnp.sqrt(8.0)
    w1 = jax.random.uniform(k1, (4, 8), jnp.float32, -bound1, bound1)
    b1 = jax.random.uniform(k2, (1, 8), jnp.float32, -bound1, bound1)
    w2 = jax.random.uniform(k3, (8, 3), jnp.float32, -bound2, bound2)
    b2 = jax.random.uniform(k4, (1, 3), jnp.float32, -bound2, bound2)
    return w1, b1, w2, b2


if __name__ == "__main__":
    key = jax.random.PRNGKey(0)
    kx, kp = jax.random.split(key)
    x = jax.random.normal(kx, (8, 4), jnp.float32)       # batch=8, in_features=4
    w1, b1, w2, b2 = init_params(kp)

    out = jax.block_until_ready(multiclass_forward(x, w1, b1, w2, b2))

    # Sanity check against pure-JAX reference.
    h_ref = jnp.maximum(x @ w1 + b1, 0.0)
    ref = jax.nn.log_softmax(h_ref @ w2 + b2, axis=1)
    assert out.shape == (8, 3)
    assert jnp.allclose(out, ref, atol=1e-5), "mismatch vs reference"

    print("KERNEL_OK")
</pallas_src>

<mosaic_0001>
module attributes {stable_mosaic.version = 11 : i64} {
  func.func @multiclass_kernel(%arg0: i32, %arg1: memref<4x128xf32, #tpu.memory_space<vmem>>, %arg2: memref<8x4xf32, #tpu.memory_space<vmem>>, %arg3: memref<8x1xf32, #tpu.memory_space<vmem>>, %arg4: memref<8x8xf32, #tpu.memory_space<vmem>>, %arg5: memref<3x1xf32, #tpu.memory_space<vmem>>, %arg6: memref<3x128xf32, #tpu.memory_space<vmem>>) attributes {dimension_semantics = [#tpu.dimension_semantics<parallel>], iteration_bounds = array<i64: 1>, scalar_prefetch = 0 : i64, scratch_operands = 0 : i64, tpu.core_type = #tpu.core_type<tc>, window_params = [{transform_indices = @transform_0, window_bounds = array<i64: 4, 128>}, {pipeline_mode = #tpu.pipeline_mode<synchronous>, transform_indices = @transform_1, window_bounds = array<i64: 8, 4>}, {pipeline_mode = #tpu.pipeline_mode<synchronous>, transform_indices = @transform_2, window_bounds = array<i64: 8, 1>}, {pipeline_mode = #tpu.pipeline_mode<synchronous>, transform_indices = @transform_3, window_bounds = array<i64: 8, 8>}, {pipeline_mode = #tpu.pipeline_mode<synchronous>, transform_indices = @transform_4, window_bounds = array<i64: 3, 1>}, {transform_indices = @transform_5, window_bounds = array<i64: 3, 128>}]} {
    %c0 = arith.constant 0 : index
    %c0_0 = arith.constant 0 : index
    %0 = vector.load %arg1[%c0, %c0_0] : memref<4x128xf32, #tpu.memory_space<vmem>>, vector<4x128xf32>
    %c0_1 = arith.constant 0 : index
    %c0_2 = arith.constant 0 : index
    %1 = vector.load %arg2[%c0_1, %c0_2] : memref<8x4xf32, #tpu.memory_space<vmem>>, vector<8x4xf32>
    %2 = vector.extract_strided_slice %1 {offsets = [0, 0], sizes = [8, 1], strides = [1, 1]} : vector<8x4xf32> to vector<8x1xf32>
    %3 = vector.extract_strided_slice %0 {offsets = [0, 0], sizes = [1, 128], strides = [1, 1]} : vector<4x128xf32> to vector<1x128xf32>
    %4 = vector.broadcast %2 : vector<8x1xf32> to vector<8x128xf32>
    %5 = vector.broadcast %3 : vector<1x128xf32> to vector<8x128xf32>
    %6 = arith.mulf %4, %5 : vector<8x128xf32>
    %7 = vector.extract_strided_slice %1 {offsets = [0, 1], sizes = [8, 1], strides = [1, 1]} : vector<8x4xf32> to vector<8x1xf32>
    %8 = vector.extract_strided_slice %0 {offsets = [1, 0], sizes = [1, 128], strides = [1, 1]} : vector<4x128xf32> to vector<1x128xf32>
    %9 = vector.broadcast %7 : vector<8x1xf32> to vector<8x128xf32>
    %10 = vector.broadcast %8 : vector<1x128xf32> to vector<8x128xf32>
    %11 = arith.mulf %9, %10 : vector<8x128xf32>
    %12 = arith.addf %6, %11 : vector<8x128xf32>
    %13 = vector.extract_strided_slice %1 {offsets = [0, 2], sizes = [8, 1], strides = [1, 1]} : vector<8x4xf32> to vector<8x1xf32>
    %14 = vector.extract_strided_slice %0 {offsets = [2, 0], sizes = [1, 128], strides = [1, 1]} : vector<4x128xf32> to vector<1x128xf32>
    %15 = vector.broadcast %13 : vector<8x1xf32> to vector<8x128xf32>
    %16 = vector.broadcast %14 : vector<1x128xf32> to vector<8x128xf32>
    %17 = arith.mulf %15, %16 : vector<8x128xf32>
    %18 = arith.addf %12, %17 : vector<8x128xf32>
    %19 = vector.extract_strided_slice %1 {offsets = [0, 3], sizes = [8, 1], strides = [1, 1]} : vector<8x4xf32> to vector<8x1xf32>
    %20 = vector.extract_strided_slice %0 {offsets = [3, 0], sizes = [1, 128], strides = [1, 1]} : vector<4x128xf32> to vector<1x128xf32>
    %21 = vector.broadcast %19 : vector<8x1xf32> to vector<8x128xf32>
    %22 = vector.broadcast %20 : vector<1x128xf32> to vector<8x128xf32>
    %23 = arith.mulf %21, %22 : vector<8x128xf32>
    %24 = arith.addf %18, %23 : vector<8x128xf32>
    %c0_3 = arith.constant 0 : index
    %c0_4 = arith.constant 0 : index
    %25 = vector.load %arg3[%c0_3, %c0_4] : memref<8x1xf32, #tpu.memory_space<vmem>>, vector<8x1xf32>
    %26 = vector.broadcast %25 : vector<8x1xf32> to vector<8x128xf32>
    %27 = arith.addf %24, %26 : vector<8x128xf32>
    %cst = arith.constant 0.000000e+00 : f32
    %28 = vector.broadcast %cst : f32 to vector<8x128xf32>
    %29 = arith.maximumf %27, %28 : vector<8x128xf32>
    %c0_5 = arith.constant 0 : index
    %c0_6 = arith.constant 0 : index
    %30 = vector.load %arg4[%c0_5, %c0_6] : memref<8x8xf32, #tpu.memory_space<vmem>>, vector<8x8xf32>
    %cst_7 = arith.constant dense<0.000000e+00> : vector<8x128xf32>
    %31 = tpu.matmul %30, %29, %cst_7 {dimension_numbers = #tpu.dot_dimension_numbers<[1], [0], [0], [1], [0, 0, 1, 1], [], []>} : vector<8x8xf32>, vector<8x128xf32>, vector<8x128xf32> -> vector<8x128xf32>
    %32 = vector.extract_strided_slice %31 {offsets = [0, 0], sizes = [3, 128], strides = [1, 1]} : vector<8x128xf32> to vector<3x128xf32>
    %c0_8 = arith.constant 0 : index
    %c0_9 = arith.constant 0 : index
    %33 = vector.load %arg5[%c0_8, %c0_9] : memref<3x1xf32, #tpu.memory_space<vmem>>, vector<3x1xf32>
    %34 = vector.broadcast %33 : vector<3x1xf32> to vector<3x128xf32>
    %35 = arith.addf %32, %34 : vector<3x128xf32>
    %cst_10 = arith.constant dense<0xFF800000> : vector<128xf32>
    %36 = vector.multi_reduction <maximumf>, %35, %cst_10 [0] : vector<3x128xf32> to vector<128xf32>
    %37 = vector.shape_cast %36 : vector<128xf32> to vector<1x128xf32>
    %38 = vector.broadcast %37 : vector<1x128xf32> to vector<3x128xf32>
    %39 = arith.subf %35, %38 : vector<3x128xf32>
    %40 = math.exp %39 : vector<3x128xf32>
    %cst_11 = arith.constant dense<0.000000e+00> : vector<128xf32>
    %41 = vector.multi_reduction <add>, %40, %cst_11 [0] : vector<3x128xf32> to vector<128xf32>
    %42 = vector.shape_cast %41 : vector<128xf32> to vector<1x128xf32>
    %43 = math.log %42 : vector<1x128xf32>
    %44 = vector.broadcast %43 : vector<1x128xf32> to vector<3x128xf32>
    %45 = arith.subf %39, %44 : vector<3x128xf32>
    %c0_12 = arith.constant 0 : index
    %c0_13 = arith.constant 0 : index
    %46 = vector.load %arg6[%c0_12, %c0_13] : memref<3x128xf32, #tpu.memory_space<vmem>>, vector<3x128xf32>
    tpu.vector_store %arg6[%c0_12, %c0_13], %45 {strides = array<i32>} : memref<3x128xf32, #tpu.memory_space<vmem>>, vector<3x128xf32>,
    return
  }
  func.func @transform_0(%arg0: i32) -> (i32, i32) {
    %c0_i32 = arith.constant 0 : i32
    %c0_i32_0 = arith.constant 0 : i32
    return %c0_i32, %arg0 : i32, i32
  }
  func.func @transform_1(%arg0: i32) -> (i32, i32) {
    %c0_i32 = arith.constant 0 : i32
    %c0_i32_0 = arith.constant 0 : i32
    %c0_i32_1 = arith.constant 0 : i32
    return %c0_i32, %c0_i32_0 : i32, i32
  }
  func.func @transform_2(%arg0: i32) -> (i32, i32) {
    %c0_i32 = arith.constant 0 : i32
    %c0_i32_0 = arith.constant 0 : i32
    %c0_i32_1 = arith.constant 0 : i32
    return %c0_i32, %c0_i32_0 : i32, i32
  }
  func.func @transform_3(%arg0: i32) -> (i32, i32) {
    %c0_i32 = arith.constant 0 : i32
    %c0_i32_0 = arith.constant 0 : i32
    %c0_i32_1 = arith.constant 0 : i32
    return %c0_i32, %c0_i32_0 : i32, i32
  }
  func.func @transform_4(%arg0: i32) -> (i32, i32) {
    %c0_i32 = arith.constant 0 : i32
    %c0_i32_0 = arith.constant 0 : i32
    %c0_i32_1 = arith.constant 0 : i32
    return %c0_i32, %c0_i32_0 : i32, i32
  }
  func.func @transform_5(%arg0: i32) -> (i32, i32) {
    %c0_i32 = arith.constant 0 : i32
    %c0_i32_0 = arith.constant 0 : i32
    return %c0_i32, %arg0 : i32, i32
  }
}

</mosaic_0001>

<llo_original>
// kernel: tpu_custom_call.1
$region0: #{tpu_custom_call.1}
  #allocation0 [shape = 'u32[]', space=smem, size = 0x4, offset = 0x4, fixed_abs, tag = 'smem constant byte address 0x4 - core index']
  #allocation1 [shape = 'u32[144,128]{1,0:T(1,128)}', space=vmem, size = 0x12000, scoped, tag = 'internal scratch']
  %s0 = inlined_call_operand.vmem [shape: f32[4,128], index: 0, kind: input, shape index: {}]
  %s1 = inlined_call_operand.vmem [shape: f32[8,4], index: 1, kind: input, shape index: {}]
  %s2 = inlined_call_operand.vmem [shape: f32[8,1], index: 2, kind: input, shape index: {}]
  %s3 = inlined_call_operand.vmem [shape: f32[8,8], index: 3, kind: input, shape index: {}]
  %s4 = inlined_call_operand.vmem [shape: f32[3,1], index: 4, kind: input, shape index: {}]
  %s5 = inlined_call_operand.hbm [shape: f32[3,128], index: 5, kind: output, shape index: {}]
  %s6 = sld [smem:[#allocation0]]
  $region30: #{tpu_custom_call.1} parent=0
    _
  %s8 = ssub.s32 1, %s6
  %s9 = scalar_select 0, %s8, %s6
  $region1: #{tpu_custom_call.1} parent=0
    #allocation2 [shape = 'u8[2048]{0}', space=vmem, size = 0x800, scoped, tag = 'output window, operand 0, single buffered']
    #allocation3 [shape = 's32[1]{0}', space=sflag, size = 0x4, scoped, tag = 'scoped memory for tpu_custom_call.1']
    %10 = vsyncpa [#allocation3], 0
    // Predicated region
    $region2: #{tpu_custom_call.1} parent=1 // pred_check
      _
    $region3: #{tpu_custom_call.1} parent=1 // pred_check_branch
      %12 = sbr.rel (0) target = $region5
    $region4: #{tpu_custom_call.1} parent=1 // pred_region
      _
    $region5: #{tpu_custom_call.1} parent=1 // pred_fallthru
      _
    // Predicated region
    $region6: #{tpu_custom_call.1} parent=1 // pred_check
      _
    $region7: #{tpu_custom_call.1} parent=1 // pred_check_branch
      %14 = sbr.rel (0) target = $region9
    $region8: #{tpu_custom_call.1} parent=1 // pred_region
      _
    $region9: #{tpu_custom_call.1} parent=1 // pred_fallthru
      _
    // Predicated region
    $region10: #{tpu_custom_call.1} parent=1 // pred_check
      _
    $region11: #{tpu_custom_call.1} parent=1 // pred_check_branch
      %16 = sbr.rel (0) target = $region13
    $region12: #{tpu_custom_call.1} parent=1 // pred_region
      _
    $region13: #{tpu_custom_call.1} parent=1 // pred_fallthru
      _
    // Predicated region
    $region14: #{tpu_custom_call.1} parent=1 // pred_check
      _
    $region15: #{tpu_custom_call.1} parent=1 // pred_check_branch
      %18 = sbr.rel (0) target = $region17
    $region16: #{tpu_custom_call.1} parent=1 // pred_region
      _
    $region17: #{tpu_custom_call.1} parent=1 // pred_fallthru
      _
    // Predicated region
    $region18: #{tpu_custom_call.1} parent=1 // pred_check
      _
    $region19: #{tpu_custom_call.1} parent=1 // pred_check_branch
      %20 = sbr.rel (0) target = $region21
    $region20: #{tpu_custom_call.1} parent=1 // pred_region
      _
    $region21: #{tpu_custom_call.1} parent=1 // pred_fallthru
      _
    %v21 = vld [vmem:[%s0] sm:$0xf]
    %v22 = vld [vmem:[%s1] sm:$0xff]
    %24 = vset.pattern.permute.xlu0 0
    %25 = vperm.xlu0 %24, %v22
    %v26 = vpop.permute.xlu0 %25
    %v28 = vlaneseq
    %v29 = vshrl.u32 %v28, 7
    %v30 = vsub.s32 0, %v29
    %v31 = vrot.slane %v21, %v30
    %v32 = vmul.f32 %v26, %v31
    %33 = vset.pattern.permute.xlu0 1
    %34 = vperm.xlu0 %33, %v22
    %v35 = vpop.permute.xlu0 %34
    %v37 = vlaneseq
    %v38 = vshrl.u32 %v37, 7
    %v39 = vsub.s32 1, %v38
    %v40 = vrot.slane %v21, %v39
    %v41 = vmul.f32 %v35, %v40
    %v42 = vadd.f32 %v32, %v41
    %43 = vset.pattern.permute.xlu0 2
    %44 = vperm.xlu0 %43, %v22
    %v45 = vpop.permute.xlu0 %44
    %v47 = vlaneseq
    %v48 = vshrl.u32 %v47, 7
    %v49 = vsub.s32 2, %v48
    %v50 = vrot.slane %v21, %v49
    %v51 = vmul.f32 %v45, %v50
    %v52 = vadd.f32 %v42, %v51
    %53 = vset.pattern.permute.xlu0 3
    %54 = vperm.xlu0 %53, %v22
    %v55 = vpop.permute.xlu0 %54
    %v57 = vlaneseq
    %v58 = vshrl.u32 %v57, 7
    %v59 = vsub.s32 3, %v58
    %v60 = vrot.slane %v21, %v59
    %v61 = vmul.f32 %v55, %v60
    %v62 = vadd.f32 %v52, %v61
    %v63 = vld [vmem:[%s2] sm:$0xff]
    %65 = vset.pattern.permute.xlu0 0
    %66 = vperm.xlu0 %65, %v63
    %v67 = vpop.permute.xlu0 %66
    %v69 = vadd.f32 %v62, %v67
    %v70 = vmax.f32 %v69, 0.0
    %v71 = vld [vmem:[%s3] sm:$0xff]
    %vm72 = vcmask 64512
    %v74 = vsel %vm72, %v71, 0
    %76 = vmatprep.subr.mxu0 0.0
    %77 = vmatpush1.msra.mxu0 %v70
    %78 = vmatprep.subr.mxu0 0.0
    %79 = vmatpush1.msra.mxu0 0.0
    %80 = vmatprep.subr.mxu0 0.0
    %81 = vmatpush1.msra.mxu0 0.0
    %82 = vmatprep.subr.mxu0 0.0
    %83 = vmatpush1.msra.mxu0 0.0
    %84 = vmatprep.subr.mxu0 0.0
    %85 = vmatpush1.msra.mxu0 0.0
    %86 = vmatprep.subr.mxu0 0.0
    %87 = vmatpush1.msra.mxu0 0.0
    %88 = vmatprep.subr.mxu0 0.0
    %89 = vmatpush1.msra.mxu0 0.0
    %90 = vmatprep.subr.mxu0 0.0
    %91 = vmatpush1.msra.mxu0 0.0
    %92 = vmatprep.subr.mxu0 0.0
    %93 = vmatpush1.msra.mxu0 0.0
    %94 = vmatprep.subr.mxu0 0.0
    %95 = vmatpush1.msra.mxu0 0.0
    %96 = vmatprep.subr.mxu0 0.0
    %97 = vmatpush1.msra.mxu0 0.0
    %98 = vmatprep.subr.mxu0 0.0
    %99 = vmatpush1.msra.mxu0 0.0
    %100 = vmatprep.subr.mxu0 0.0
    %101 = vmatpush1.msra.mxu0 0.0
    %102 = vmatprep.subr.mxu0 0.0
    %103 = vmatpush1.msra.mxu0 0.0
    %104 = vmatprep.subr.mxu0 0.0
    %105 = vmatpush1.msra.mxu0 0.0
    %106 = vmatprep.subr.mxu0 0.0
    %107 = vmatpush1.msra.mxu0 0.0
    %108 = vmatprep.subr.mxu0 0.0
    %109 = vmatpush1.msra.mxu0 0.0
    %110 = vmatprep.subr.mxu0 0.0
    %111 = vmatpush1.msra.mxu0 0.0
    %112 = vmatprep.subr.mxu0 0.0
    %113 = vmatpush1.msra.mxu0 0.0
    %114 = vmatprep.subr.mxu0 0.0
    %115 = vmatpush1.msra.mxu0 0.0
    %116 = vmatprep.subr.mxu0 0.0
    %117 = vmatpush1.msra.mxu0 0.0
    %118 = vmatprep.subr.mxu0 0.0
    %119 = vmatpush1.msra.mxu0 0.0
    %120 = vmatprep.subr.mxu0 0.0
    %121 = vmatpush1.msra.mxu0 0.0
    %122 = vmatprep.subr.mxu0 0.0
    %123 = vmatpush1.msra.mxu0 0.0
    %124 = vmatprep.subr.mxu0 0.0
    %125 = vmatpush1.msra.mxu0 0.0
    %126 = vmatprep.subr.mxu0 0.0
    %127 = vmatpush1.msra.mxu0 0.0
    %128 = vmatprep.subr.mxu0 0.0
    %129 = vmatpush1.msra.mxu0 0.0
    %130 = vmatprep.subr.mxu0 0.0
    %131 = vmatpush1.msra.mxu0 0.0
    %132 = vmatprep.subr.mxu0 0.0
    %133 = vmatpush1.msra.mxu0 0.0
    %134 = vmatprep.subr.mxu0 0.0
    %135 = vmatpush1.msra.mxu0 0.0
    %136 = vmatprep.subr.mxu0 0.0
    %137 = vmatpush1.msra.mxu0 0.0
    %138 = vmatprep.subr.mxu0 0.0
    %139 = vmatpush1.msra.mxu0 0.0
    %140 = vmatprep.mubr.f32.mxu0 0.0
    %141 = vmatmul.mubr.f32.gmra.mrb[0].mxu0 %v74
    %v142 = vpop.f32.mrb[0].mxu0
    %v143 = vadd.f32 0.0, %v142
    %v144 = vpop.f32.mrb[0].mxu0
    %145 = vdwg.mxu0
    %v146 = vld [vmem:[%s4] sm:$0x7]
    %148 = vset.pattern.permute.xlu0 0
    %149 = vperm.xlu0 %148, %v146
    %v150 = vpop.permute.xlu0 %149
    %v152 = vadd.f32 %v143, %v150
    %vm153 = vcmask 1042432
    %v154 = vsel %vm153, %v152, -inf
    %v155 = vrot.slane %v154, 4
    %v156 = vmax.f32 %v154, %v155
    %v157 = vrot.slane %v156, 2
    %v158 = vmax.f32 %v156, %v157
    %v159 = vrot.slane %v158, 1
    %v160 = vmax.f32 %v158, %v159
    %v161 = vsub.f32 %v152, %v160
    %v162 = vmul.f32 %v161, 1.442695
    %v163 = vpow.pop %v162
    %v164 = vsel %vm153, %v163, 0.0
    %v165 = vrot.slane %v164, 4
    %v166 = vadd.f32 %v164, %v165
    %v167 = vrot.slane %v166, 2
    %v168 = vadd.f32 %v166, %v167
    %v169 = vrot.slane %v168, 1
    %v170 = vadd.f32 %v168, %v169
    %v171 = vlog2.pop %v170
    %v172 = vmul.f32 %v171, 0.6931472
    %v173 = vsub.f32 %v161, %v172
    %174 = vst [vmem:[#allocation2] sm:$0x7] %v173
    // Predicated region
    $region22: #{tpu_custom_call.1} parent=1 // pred_check
      _
    $region23: #{tpu_custom_call.1} parent=1 // pred_check_branch
      %176 = sbr.rel (0) target = $region25
    $region24: #{tpu_custom_call.1} parent=1 // pred_region
      %s178 = ssub.s32 64, 64
      %179 = vsyncadd [#allocation3], %s178
      %s181 = sshll.u32 [#allocation2], 4
      %s182 = int_to_ptr.vmem [resolvable:$true] %s181
      %184 = dma.vmem_to_hbm [thread:$0]  %s182, 64, %s5, [#allocation3]
    $region25: #{tpu_custom_call.1} parent=1 // pred_fallthru
      _
    // Predicated region
    $region26: #{tpu_custom_call.1} parent=1 // pred_check
      _
    $region27: #{tpu_custom_call.1} parent=1 // pred_check_branch
      %186 = sbr.rel (0) target = $region29
    $region28: #{tpu_custom_call.1} parent=1 // pred_region
      %187 = dma.done [#allocation3], 64
    $region29: #{tpu_custom_call.1} parent=1 // pred_fallthru
      _
    %188 = vsyncpa [#allocation3], 1

</llo_original>
